<compile_context>
chip_gen: v6e
topology: v6e:2x2x1
jax: 0.10.0
libtpu: 0.0.40
codegen_flags: <defaults>
</compile_context>

<pallas_src>
import jax
import jax.numpy as jnp
from jax.experimental import pallas as pl
from jax.experimental.pallas import tpu as pltpu


def _rmsnorm_kernel(x_ref, scale_ref, o_ref):
    # All math in float32, matching `x.float()` in the torch module.
    # Pass 1: mean of squares (f32 accumulation).
    xf = x_ref[...].astype(jnp.float32)               # (TM, D)
    ms = jnp.mean(xf * xf, axis=-1, keepdims=True)    # (TM, 1)
    rrms = jax.lax.rsqrt(ms + 1e-6)
    # Pass 2: re-read the narrow-dtype tile from VMEM (VMEM BW >> HBM BW)
    # instead of keeping the full f32 upcast live across both passes.
    o_ref[...] = (
        x_ref[...].astype(jnp.float32) * rrms * scale_ref[...]
    ).astype(o_ref.dtype)


def _tpu_vmem_capacity_bytes() -> int:
    """Physical VMEM per core; conservative (v7x = 64 MiB) fallback."""
    try:
        info = pltpu.get_tpu_info()
        cap = getattr(info, "vmem_capacity_bytes", None)
        if cap:
            return int(cap)
    except Exception:
        pass
    return 64 << 20


def _pick_row_tile(rows: int, dim: int, itemsize: int, vmem_budget_bytes: int,
                   *, min_grid: int = 2) -> int:
    """Largest sublane-aligned row tile that fits the VMEM working-set budget."""
    # Sublane packing: 8 rows/vreg for 4-byte dtypes, 16 for 2-byte, 32 for 1-byte.
    packing = max(8, 32 // max(1, itemsize))
    # Per-row working set: double-buffered in + out blocks (2 * 2 * dim * itemsize)
    # plus roughly one transient f32 copy of the row inside the body (4 * dim).
    bytes_per_row = dim * (4 * itemsize + 4)
    tm = max(packing, vmem_budget_bytes // max(1, bytes_per_row))
    tm = (tm // packing) * packing
    # Keep >= min_grid grid steps when there's enough work so the single
    # "parallel" row axis can be sharded across v7x's two TensorCores.
    if rows >= packing * min_grid:
        tm = min(tm, max(packing, ((rows // min_grid) // packing) * packing))
    rows_rounded = ((rows + packing - 1) // packing) * packing
    return max(packing, min(tm, rows_rounded))


def rmsnorm(x: jax.Array, scale: jax.Array) -> jax.Array:
    """RMSNorm over the last axis. Output dtype == input dtype."""
    orig_shape = x.shape
    dim = orig_shape[-1]
    assert scale.shape == (dim,)

    rows = 1
    for s in orig_shape[:-1]:
        rows *= s
    x2d = x.reshape(rows, dim)
    # Pre-cast scale to f32 in the wrapper; constant index_map DMAs it once.
    scale2d = scale.astype(jnp.float32).reshape(1, dim)

    itemsize = jnp.dtype(x.dtype).itemsize
    vmem_cap = _tpu_vmem_capacity_bytes()
    # ~3/8 of physical VMEM for the pipelined working set:
    #   128 MiB chips (v5e/v6e) -> 48 MiB, 64 MiB (v7x) -> 24 MiB.
    vmem_budget = (vmem_cap * 3) // 8
    tm = _pick_row_tile(rows, dim, itemsize, vmem_budget)

    # No padding: ragged last block is clipped by Pallas (OOB rows discarded
    # on writeback; row-wise math keeps valid rows exact).
    grid_m = pl.cdiv(rows, tm)

    # Scoped-VMEM limit from the actual working set (2x double-buffered in+out
    # blocks + ~2 f32 temporaries + scale) plus margin, capped below physical.
    block_bytes = tm * dim * itemsize
    working_set = 4 * block_bytes + 2 * tm * dim * 4 + 2 * dim * 4
    vmem_limit = min(max(32 << 20, int(working_set * 1.25) + (4 << 20)),
                     vmem_cap - (8 << 20))

    cost = pl.CostEstimate(
        flops=3 * rows * dim,
        transcendentals=rows,
        bytes_accessed=2 * rows * dim * itemsize + dim * 4,
    )

    out2d = pl.pallas_call(
        _rmsnorm_kernel,
        out_shape=jax.ShapeDtypeStruct((rows, dim), x.dtype),
        grid_spec=pltpu.PrefetchScalarGridSpec(
            num_scalar_prefetch=0,
            grid=(grid_m,),
            in_specs=[
                pl.BlockSpec((tm, dim), lambda i: (i, 0)),
                pl.BlockSpec((1, dim), lambda i: (0, 0)),
            ],
            out_specs=pl.BlockSpec((tm, dim), lambda i: (i, 0)),
        ),
        compiler_params=pltpu.CompilerParams(
            dimension_semantics=("parallel",),
            vmem_limit_bytes=vmem_limit,
        ),
        cost_estimate=cost,
    )(x2d, scale2d)

    return out2d.reshape(orig_shape)


def rmsnorm_ref(x, scale):
    xf = x.astype(jnp.float32)
    rrms = jax.lax.rsqrt(jnp.mean(xf * xf, axis=-1, keepdims=True) + 1e-6)
    return (xf * rrms * scale.astype(jnp.float32)).astype(x.dtype)


if __name__ == "__main__":
    key = jax.random.PRNGKey(0)
    batch, seq, hidden = 2, 8, 32

    x = jax.random.normal(key, (batch, seq, hidden), dtype=jnp.float32).astype(
        jnp.bfloat16
    )
    # Parameter init matches nn.Parameter(torch.ones(dim)) but perturbed
    # deterministically so the scale actually participates in the test.
    scale = jnp.ones((hidden,), dtype=jnp.float32) + 0.1 * jax.random.normal(
        jax.random.PRNGKey(1), (hidden,), dtype=jnp.float32
    )

    out = jax.block_until_ready(rmsnorm(x, scale))
    ref = rmsnorm_ref(x, scale)
    assert out.dtype == x.dtype
    assert out.shape == x.shape
    assert jnp.allclose(
        out.astype(jnp.float32), ref.astype(jnp.float32), atol=1e-2, rtol=1e-2
    )

    # Second check: row count (3*5=15) not a multiple of the 16-row tile —
    # exercises the clipped ragged last block (no pad / slice copies).
    x_odd = jax.random.normal(
        jax.random.PRNGKey(2), (3, 5, hidden), dtype=jnp.float32
    ).astype(jnp.bfloat16)
    out_odd = jax.block_until_ready(rmsnorm(x_odd, scale))
    ref_odd = rmsnorm_ref(x_odd, scale)
    assert out_odd.shape == x_odd.shape and out_odd.dtype == x_odd.dtype
    assert jnp.allclose(
        out_odd.astype(jnp.float32), ref_odd.astype(jnp.float32),
        atol=1e-2, rtol=1e-2,
    )

    print("KERNEL_OK")
</pallas_src>

<mosaic_0001>
module attributes {stable_mosaic.version = 11 : i64} {
  func.func @_rmsnorm_kernel(%arg0: i32, %arg1: memref<16x32xbf16, #tpu.memory_space<vmem>>, %arg2: memref<1x32xf32, #tpu.memory_space<vmem>>, %arg3: memref<16x32xbf16, #tpu.memory_space<vmem>>) attributes {dimension_semantics = [#tpu.dimension_semantics<parallel>], iteration_bounds = array<i64: 1>, scalar_prefetch = 0 : i64, scratch_operands = 0 : i64, tpu.core_type = #tpu.core_type<tc>, window_params = [{transform_indices = @transform_0, window_bounds = array<i64: 16, 32>}, {pipeline_mode = #tpu.pipeline_mode<synchronous>, transform_indices = @transform_1, window_bounds = array<i64: 1, 32>}, {transform_indices = @transform_2, window_bounds = array<i64: 16, 32>}]} {
    %c0 = arith.constant 0 : index
    %c0_0 = arith.constant 0 : index
    %0 = vector.load %arg1[%c0, %c0_0] : memref<16x32xbf16, #tpu.memory_space<vmem>>, vector<16x32xbf16>
    %1 = arith.extf %0 : vector<16x32xbf16> to vector<16x32xf32>
    %2 = arith.mulf %1, %1 : vector<16x32xf32>
    %cst = arith.constant dense<0.000000e+00> : vector<16xf32>
    %3 = vector.multi_reduction <add>, %2, %cst [1] : vector<16x32xf32> to vector<16xf32>
    %4 = vector.shape_cast %3 : vector<16xf32> to vector<16x1xf32>
    %cst_1 = arith.constant 3.200000e+01 : f32
    %5 = vector.broadcast %cst_1 : f32 to vector<16x1xf32>
    %6 = arith.divf %4, %5 : vector<16x1xf32>
    %cst_2 = arith.constant 9.99999997E-7 : f32
    %7 = vector.broadcast %cst_2 : f32 to vector<16x1xf32>
    %8 = arith.addf %6, %7 : vector<16x1xf32>
    %9 = math.rsqrt %8 : vector<16x1xf32>
    %c0_3 = arith.constant 0 : index
    %c0_4 = arith.constant 0 : index
    %10 = vector.load %arg1[%c0_3, %c0_4] : memref<16x32xbf16, #tpu.memory_space<vmem>>, vector<16x32xbf16>
    %11 = arith.extf %10 : vector<16x32xbf16> to vector<16x32xf32>
    %12 = vector.broadcast %9 : vector<16x1xf32> to vector<16x32xf32>
    %13 = arith.mulf %11, %12 : vector<16x32xf32>
    %c0_5 = arith.constant 0 : index
    %c0_6 = arith.constant 0 : index
    %14 = vector.load %arg2[%c0_5, %c0_6] : memref<1x32xf32, #tpu.memory_space<vmem>>, vector<1x32xf32>
    %15 = vector.broadcast %14 : vector<1x32xf32> to vector<16x32xf32>
    %16 = arith.mulf %13, %15 : vector<16x32xf32>
    %17 = arith.truncf %16 : vector<16x32xf32> to vector<16x32xbf16>
    %c0_7 = arith.constant 0 : index
    %c0_8 = arith.constant 0 : index
    %18 = vector.load %arg3[%c0_7, %c0_8] : memref<16x32xbf16, #tpu.memory_space<vmem>>, vector<16x32xbf16>
    tpu.vector_store %arg3[%c0_7, %c0_8], %17 {strides = array<i32>} : memref<16x32xbf16, #tpu.memory_space<vmem>>, vector<16x32xbf16>,
    return
  }
  func.func @transform_0(%arg0: i32) -> (i32, i32) {
    %c0_i32 = arith.constant 0 : i32
    %c0_i32_0 = arith.constant 0 : i32
    return %arg0, %c0_i32 : i32, i32
  }
  func.func @transform_1(%arg0: i32) -> (i32, i32) {
    %c0_i32 = arith.constant 0 : i32
    %c0_i32_0 = arith.constant 0 : i32
    %c0_i32_1 = arith.constant 0 : i32
    return %c0_i32, %c0_i32_0 : i32, i32
  }
  func.func @transform_2(%arg0: i32) -> (i32, i32) {
    %c0_i32 = arith.constant 0 : i32
    %c0_i32_0 = arith.constant 0 : i32
    return %arg0, %c0_i32 : i32, i32
  }
}

</mosaic_0001>

<llo_original>
// kernel: tpu_custom_call.1
$region0: #{tpu_custom_call.1}
  #allocation0 [shape = 'u32[]', space=smem, size = 0x4, offset = 0x4, fixed_abs, tag = 'smem constant byte address 0x4 - core index']
  #allocation1 [shape = 'u32[144,128]{1,0:T(1,128)}', space=vmem, size = 0x12000, scoped, tag = 'internal scratch']
  %s0 = inlined_call_operand.hbm [shape: bf16[16,32], index: 0, kind: input, shape index: {}]
  %s1 = inlined_call_operand.vmem [shape: f32[1,32], index: 1, kind: input, shape index: {}]
  %s2 = inlined_call_operand.hbm [shape: bf16[16,32], index: 2, kind: output, shape index: {}]
  %s3 = sld [smem:[#allocation0]]
  $region22: #{tpu_custom_call.1} parent=0
    _
  %s5 = ssub.s32 1, %s3
  %s6 = scalar_select 0, %s5, %s3
  $region1: #{tpu_custom_call.1} parent=0
    #allocation2 [shape = 'u8[4096]{0}', space=vmem, size = 0x1000, scoped, tag = 'input window, operand 0, single buffered']
    #allocation3 [shape = 's32[1]{0}', space=sflag, size = 0x4, scoped, tag = 'scoped memory for tpu_custom_call.1']
    #allocation4 [shape = 's32[1]{0}', space=sflag, size = 0x4, scoped, tag = 'scoped memory for tpu_custom_call.1']
    #allocation5 [shape = 'u8[4096]{0}', space=vmem, size = 0x1000, scoped, tag = 'output window, operand 0, single buffered']
    %7 = vsyncpa [#allocation3], 0
    %8 = vsyncpa [#allocation4], 0
    // Predicated region
    $region2: #{tpu_custom_call.1} parent=1 // pred_check
      _
    $region3: #{tpu_custom_call.1} parent=1 // pred_check_branch
      %10 = sbr.rel (0) target = $region5
    $region4: #{tpu_custom_call.1} parent=1 // pred_region
      %s12 = ssub.s32 128, 128
      %13 = vsyncadd [#allocation3], %s12
      %s14 = sshll.u32 [#allocation2], 4
      %s15 = int_to_ptr.vmem [resolvable:$true] %s14
      %20 = dma.hbm_to_vmem [thread:$0]  %s0, 128, %s15, [#allocation3], 64, 64, 4
    $region5: #{tpu_custom_call.1} parent=1 // pred_fallthru
      _
    // Predicated region
    $region6: #{tpu_custom_call.1} parent=1 // pred_check
      _
    $region7: #{tpu_custom_call.1} parent=1 // pred_check_branch
      %22 = sbr.rel (0) target = $region9
    $region8: #{tpu_custom_call.1} parent=1 // pred_region
      _
    $region9: #{tpu_custom_call.1} parent=1 // pred_fallthru
      _
    // Predicated region
    $region10: #{tpu_custom_call.1} parent=1 // pred_check
      _
    $region11: #{tpu_custom_call.1} parent=1 // pred_check_branch
      %24 = sbr.rel (0) target = $region13
    $region12: #{tpu_custom_call.1} parent=1 // pred_region
      %25 = dma.done [#allocation3], 128
    $region13: #{tpu_custom_call.1} parent=1 // pred_fallthru
      _
    %v26 = vld [vmem:[#allocation2] sm:$0xf]
    %v27 = vld [vmem:[#allocation2 + $0x4] sm:$0xf]
    %v28 = vunpack.c.l.bf16 %v26
    %v29 = vunpack.c.l.bf16 %v27
    %v30 = vmul.f32 %v28, %v28
    %v31 = vmul.f32 %v29, %v29
    %vm32 = vcmask 261120
    %v33 = vsel %vm32, %v30, 0.0
    %34 = vadd.xlane.f32.xlu0 %v33
    %v35 = vpop.xlane.xlu0 %34
    %v36 = vsel %vm32, %v31, 0.0
    %37 = vadd.xlane.f32.xlu0 %v36
    %v38 = vpop.xlane.xlu0 %37
    %v39 = vrcp.pop 32.0
    %v40 = vmul.f32 %v35, %v39
    %v41 = vmul.f32 %v38, %v39
    %v42 = vadd.f32 %v40, 1e-06
    %v43 = vadd.f32 %v41, 1e-06
    %v44 = vrsqrt.pop %v42
    %v45 = vrsqrt.pop %v43
    %v46 = vmul.f32 %v28, %v44
    %v47 = vmul.f32 %v29, %v45
    %v48 = vld [vmem:[%s1] sm:$0x1]
    %v50 = vlaneseq
    %v51 = vshrl.u32 %v50, 7
    %v52 = vsub.s32 0, %v51
    %v53 = vrot.slane %v48, %v52
    %v55 = vmul.f32 %v46, %v53
    %v56 = vmul.f32 %v47, %v53
    %v57 = vpack.c.bf16 %v56, %v55
    %v59 = vunpack.c.l.b16 %v57
    %v60 = vunpack.c.h.b16 %v57
    %v61 = vpack.c.b16 %v59, %v59
    %v62 = vpack.c.b16 %v60, %v60
    %vm65 = vcmask 257024
    %66 = vst.msk [vmem:[#allocation5] sm:$0xf] %vm65, %v61
    %67 = vst.msk [vmem:[#allocation5 + $0x4] sm:$0xf] %vm65, %v62
    // Predicated region
    $region14: #{tpu_custom_call.1} parent=1 // pred_check
      _
    $region15: #{tpu_custom_call.1} parent=1 // pred_check_branch
      %69 = sbr.rel (0) target = $region17
    $region16: #{tpu_custom_call.1} parent=1 // pred_region
      %s71 = ssub.s32 128, 128
      %72 = vsyncadd [#allocation4], %s71
      %s73 = sshll.u32 [#allocation5], 4
      %s74 = int_to_ptr.vmem [resolvable:$true] %s73
      %79 = dma.vmem_to_hbm [thread:$0]  %s74, 128, %s2, [#allocation4], 64, 64, 4
    $region17: #{tpu_custom_call.1} parent=1 // pred_fallthru
      _
    // Predicated region
    $region18: #{tpu_custom_call.1} parent=1 // pred_check
      _
    $region19: #{tpu_custom_call.1} parent=1 // pred_check_branch
      %81 = sbr.rel (0) target = $region21
    $region20: #{tpu_custom_call.1} parent=1 // pred_region
      %82 = dma.done [#allocation4], 128
    $region21: #{tpu_custom_call.1} parent=1 // pred_fallthru
      _
    %83 = vsyncpa [#allocation3], 1
    %84 = vsyncpa [#allocation4], 1

</llo_original>
